<compile_context>
chip_gen: v5e
topology: v5e:2x2
jax: 0.10.0
libtpu: 0.0.40
codegen_flags: <defaults>
</compile_context>

<pallas_src>
import jax
import jax.numpy as jnp
from jax.experimental import pallas as pl
from jax.experimental.pallas import tpu as pltpu

_EPS = 1e-8          # torch.cosine_similarity default
_LANE = 128
_SUB = 8
_VMEM_CAP = 40 * 1024 * 1024     # conservative cap, below v7x's 64 MiB physical VMEM
_VMEM_SLACK = 4 * 1024 * 1024    # headroom for compiler scratch / spills


def _round_up(x, m):
    return (x + m - 1) // m * m


def _cosine_mse_partial(l, r, tile_idx, tm, n_pairs, o_ref):
    """Shared epilogue: f32 cosine sim, MSE vs implicit [1..1,0..0] target,
    one lane-dense (8,128) partial-sum slab per tile."""
    half = n_pairs // 2
    # TODO(synk): for very large d_emb, chunk these reductions over 128-lane
    # slices with running accumulators to cap live vregs (review item).
    num = jnp.sum(l * r, axis=-1, keepdims=True)        # (tm, 1)
    n1s = jnp.sum(l * l, axis=-1, keepdims=True)
    n2s = jnp.sum(r * r, axis=-1, keepdims=True)
    # torch >= 1.9 semantics: num / (max(||l||, eps) * max(||r||, eps)),
    # via 1/max(sqrt(x), eps) == min(rsqrt(x), 1/eps)  (EUP rsqrt, no divide).
    inv1 = jnp.minimum(jax.lax.rsqrt(n1s), 1.0 / _EPS)
    inv2 = jnp.minimum(jax.lax.rsqrt(n2s), 1.0 / _EPS)
    cos = num * inv1 * inv2

    # target = cat(ones(n/2), zeros(n/2)); rows padded past n_pairs are masked.
    row = tile_idx * tm + jax.lax.broadcasted_iota(jnp.int32, (tm, 1), 0)
    target = jnp.where(row < half, 1.0, 0.0).astype(jnp.float32)
    diff = cos - target
    sq = jnp.where(row < n_pairs, diff * diff, 0.0)

    # Lane-dense (8, 128) slab per tile (avoids masked sub-128 stores); the
    # tiny reduction over tiles happens in the wrapper.
    o_ref[...] = jnp.full((1, _SUB, _LANE), jnp.sum(sq), dtype=jnp.float32)


def _make_resident_kernel(n_pairs, tm, b_pad, compute_dtype):
    """Main path: `data` resident in VMEM, in-kernel row gather (one-hot MXU)."""

    def kernel(left_ref, right_ref, data_ref, w1_ref, w2_ref, o_ref):
        i = pl.program_id(0)
        data = data_ref[...]                                        # (b_pad, d_in_p) bf16

        # In-kernel gather: one-hot selection matmul on the MXU (exact: one
        # nonzero per row).  Keeps the gathered streams entirely out of HBM.
        col = jax.lax.broadcasted_iota(jnp.int32, (tm, b_pad), 1)
        sel_l = jnp.where(left_ref[...] == col, 1.0, 0.0).astype(compute_dtype)
        sel_r = jnp.where(right_ref[...] == col, 1.0, 0.0).astype(compute_dtype)
        rows_l = jnp.dot(sel_l, data, preferred_element_type=jnp.float32).astype(compute_dtype)
        rows_r = jnp.dot(sel_r, data, preferred_element_type=jnp.float32).astype(compute_dtype)

        # Dual-head linear encoder on the gathered rows only (bf16 in, f32 acc).
        l = jnp.dot(rows_l, w1_ref[...], preferred_element_type=jnp.float32)
        r = jnp.dot(rows_r, w2_ref[...], preferred_element_type=jnp.float32)

        _cosine_mse_partial(l, r, i, tm, n_pairs, o_ref)

    return kernel


def _make_pregathered_kernel(n_pairs, tm):
    """Fallback path (very large B): rows gathered in the wrapper as bf16."""

    def kernel(left_ref, right_ref, w1_ref, w2_ref, o_ref):
        i = pl.program_id(0)
        l = jnp.dot(left_ref[...], w1_ref[...], preferred_element_type=jnp.float32)
        r = jnp.dot(right_ref[...], w2_ref[...], preferred_element_type=jnp.float32)
        _cosine_mse_partial(l, r, i, tm, n_pairs, o_ref)

    return kernel


def cosine_similarity_loss1(data, matches, double_left, double_right, w1, w2,
                            *, compute_dtype=jnp.bfloat16):
    """Forward pass of CosineSimilarityLoss1 (`matches` is unused, as in the spec)."""
    del matches
    n_pairs = int(double_left.shape[0])
    assert n_pairs % 2 == 0, "spec implies an even number of pairs"
    b, d_in = data.shape
    d_emb = w1.shape[1]
    itemsize = jnp.dtype(compute_dtype).itemsize

    # Lane-dense feature dims (multiples of 128).  Zero-padding K/N once in HBM
    # is far cheaper than lane-sparse vregs/DMAs every tile.  (256 would fully
    # fill the 256-wide v6e/v7x MXUs; 128 is the portable, bandwidth-neutral
    # choice and already fills every vreg lane.)
    d_in_p = _round_up(d_in, _LANE)
    d_emb_p = _round_up(d_emb, _LANE)
    b_pad = _round_up(b, _SUB)

    # Pair-tile size: large tiles (up to 512 rows) to approach the roofline and
    # amortize per-grid-step overhead; for big problems keep >=2 tiles so both
    # v7x TensorCores get work through the "parallel" grid axis.
    if n_pairs <= 256:
        tm = _round_up(n_pairs, _SUB)          # single tile
    else:
        tm = min(512, _round_up(n_pairs, 2 * _LANE) // 2)
    n_pad = _round_up(n_pairs, tm)
    num_tiles = n_pad // tm

    w_bytes = 2 * d_in_p * d_emb_p * itemsize
    data_res_bytes = b_pad * d_in_p * itemsize
    # Keep `data` resident in VMEM (and gather in-kernel) whenever it is small;
    # otherwise fall back to a wrapper-side bf16 gather.
    use_resident = (data_res_bytes <= (4 << 20)) and (b_pad <= 2048)

    def footprint(tm_):
        dbl = 2  # default double-buffering of every pallas_call operand
        # TODO(synk): use pipeline_mode=pl.Buffered(1) on the constant-index
        # resident operands (weights, data) to drop their second buffer.
        idx_bytes = 2 * tm_ * _LANE * 4 * dbl            # (tm,1) i32 pads lanes to 128
        out_bytes = _SUB * _LANE * 4 * dbl
        if use_resident:
            stream = data_res_bytes * dbl
            live = 2 * tm_ * b_pad * itemsize + 4 * tm_ * d_emb_p * 4
        else:
            stream = 2 * tm_ * d_in_p * itemsize * dbl   # left/right row tiles
            live = 4 * tm_ * d_emb_p * 4
        return w_bytes * dbl + stream + idx_bytes + out_bytes + live

    # Co-size the tile with the VMEM budget (binds first on v5e's 16 MiB scoped
    # default and v7x's 64 MiB physical VMEM).
    while footprint(tm) + _VMEM_SLACK > _VMEM_CAP and tm > _LANE:
        tm = max(_LANE, tm // 2)
        n_pad = _round_up(n_pairs, tm)
        num_tiles = n_pad // tm
    vmem_limit = int(min(max(footprint(tm) + _VMEM_SLACK, 16 << 20), _VMEM_CAP))
    # TODO(synk): if the two weight heads alone exceed the budget (huge d_in on
    # v7x), add a K grid axis ("arbitrary", last) with per-head f32 accumulators.

    # Zero-padded bf16 weights (pad columns/rows contribute exactly 0).
    w1c = jnp.pad(w1.astype(compute_dtype), ((0, d_in_p - d_in), (0, d_emb_p - d_emb)))
    w2c = jnp.pad(w2.astype(compute_dtype), ((0, d_in_p - d_in), (0, d_emb_p - d_emb)))

    # Index vectors padded with 0 (a valid row); padded pairs are masked in-kernel.
    pad_n = n_pad - n_pairs
    lidx = jnp.pad(double_left.astype(jnp.int32), (0, pad_n))
    ridx = jnp.pad(double_right.astype(jnp.int32), (0, pad_n))

    compiler_params = pltpu.CompilerParams(
        dimension_semantics=("parallel",),    # pair tiles are independent
        vmem_limit_bytes=vmem_limit,
    )
    out_shape = jax.ShapeDtypeStruct((num_tiles, _SUB, _LANE), jnp.float32)
    out_spec = pl.BlockSpec((1, _SUB, _LANE), lambda i: (i, 0, 0))
    w_spec = pl.BlockSpec((d_in_p, d_emb_p), lambda i: (0, 0))   # weights stay resident

    if use_resident:
        data_p = jnp.pad(data.astype(compute_dtype),
                         ((0, b_pad - b), (0, d_in_p - d_in)))
        partials = pl.pallas_call(
            _make_resident_kernel(n_pairs, tm, b_pad, compute_dtype),
            out_shape=out_shape,
            grid=(num_tiles,),
            in_specs=[
                pl.BlockSpec((tm, 1), lambda i: (i, 0)),          # left indices
                pl.BlockSpec((tm, 1), lambda i: (i, 0)),          # right indices
                pl.BlockSpec((b_pad, d_in_p), lambda i: (0, 0)),  # data resident
                w_spec,
                w_spec,
            ],
            out_specs=out_spec,
            compiler_params=compiler_params,
        )(lidx.reshape(n_pad, 1), ridx.reshape(n_pad, 1), data_p, w1c, w2c)
    else:
        # Fallback: gather in the wrapper, but cast to bf16 BEFORE the gather
        # and fold the pad into the (already padded) gather indices, so the two
        # (n_pad, d_in_p) streams are written and re-read once, in bf16.
        data_c = jnp.pad(data.astype(compute_dtype), ((0, 0), (0, d_in_p - d_in)))
        left = jnp.take(data_c, lidx, axis=0)
        right = jnp.take(data_c, ridx, axis=0)
        partials = pl.pallas_call(
            _make_pregathered_kernel(n_pairs, tm),
            out_shape=out_shape,
            grid=(num_tiles,),
            in_specs=[
                pl.BlockSpec((tm, d_in_p), lambda i: (i, 0)),
                pl.BlockSpec((tm, d_in_p), lambda i: (i, 0)),
                w_spec,
                w_spec,
            ],
            out_specs=out_spec,
            compiler_params=compiler_params,
        )(left, right, w1c, w2c)

    # Tiny final reduction over num_tiles partial sums, then MSE mean.
    return jnp.sum(partials[:, 0, 0]) / n_pairs


def _reference(data, double_left, double_right, w1, w2, compute_dtype=jnp.bfloat16):
    """Pure-JAX reference mirroring the PyTorch module structure
    (torch>=1.9 cosine_similarity clamps each norm separately by eps)."""
    d = data.astype(compute_dtype)
    x_one = jnp.dot(d, w1.astype(compute_dtype), preferred_element_type=jnp.float32)
    x_two = jnp.dot(d, w2.astype(compute_dtype), preferred_element_type=jnp.float32)
    l = x_one[double_left]
    r = x_two[double_right]
    num = jnp.sum(l * r, axis=-1)
    denom = (jnp.maximum(jnp.linalg.norm(l, axis=-1), _EPS)
             * jnp.maximum(jnp.linalg.norm(r, axis=-1), _EPS))
    cos = num / denom
    n = double_left.shape[0]
    target = jnp.concatenate([jnp.ones(n // 2), jnp.zeros(n // 2)])
    return jnp.mean((cos - target) ** 2)


if __name__ == "__main__":
    B, D_in, D_emb, N_pairs = 8, 32, 32, 8

    key = jax.random.PRNGKey(0)
    k_data, k_w1, k_w2, k_left, k_right = jax.random.split(key, 5)

    data = jax.random.normal(k_data, (B, D_in), dtype=jnp.float32)
    w1 = jax.random.normal(k_w1, (D_in, D_emb), dtype=jnp.float32) * 0.1
    w2 = jax.random.normal(k_w2, (D_in, D_emb), dtype=jnp.float32) * 0.1
    double_left = jax.random.randint(k_left, (N_pairs,), 0, B, dtype=jnp.int32)
    double_right = jax.random.randint(k_right, (N_pairs,), 0, B, dtype=jnp.int32)

    loss = jax.jit(cosine_similarity_loss1)(
        data, None, double_left, double_right, w1, w2)
    loss = jax.block_until_ready(loss)

    ref = _reference(data, double_left, double_right, w1, w2)
    assert jnp.allclose(loss, ref, atol=1e-3, rtol=1e-3), (loss, ref)

    print("KERNEL_OK")
</pallas_src>

<mosaic_0001>
module attributes {stable_mosaic.version = 11 : i64} {
  func.func @kernel(%arg0: i32, %arg1: memref<8x1xi32, #tpu.memory_space<vmem>>, %arg2: memref<8x1xi32, #tpu.memory_space<vmem>>, %arg3: memref<8x128xbf16, #tpu.memory_space<vmem>>, %arg4: memref<128x128xbf16, #tpu.memory_space<vmem>>, %arg5: memref<128x128xbf16, #tpu.memory_space<vmem>>, %arg6: memref<1x8x128xf32, #tpu.memory_space<vmem>>) attributes {dimension_semantics = [#tpu.dimension_semantics<parallel>], iteration_bounds = array<i64: 1>, scalar_prefetch = 0 : i64, scratch_operands = 0 : i64, tpu.core_type = #tpu.core_type<tc>, window_params = [{transform_indices = @transform_0, window_bounds = array<i64: 8, 1>}, {transform_indices = @transform_1, window_bounds = array<i64: 8, 1>}, {pipeline_mode = #tpu.pipeline_mode<synchronous>, transform_indices = @transform_2, window_bounds = array<i64: 8, 128>}, {pipeline_mode = #tpu.pipeline_mode<synchronous>, transform_indices = @transform_3, window_bounds = array<i64: 128, 128>}, {pipeline_mode = #tpu.pipeline_mode<synchronous>, transform_indices = @transform_4, window_bounds = array<i64: 128, 128>}, {transform_indices = @transform_5, window_bounds = array<i64: 1, 8, 128>}]} {
    %c0 = arith.constant 0 : index
    %c0_0 = arith.constant 0 : index
    %0 = vector.load %arg3[%c0, %c0_0] : memref<8x128xbf16, #tpu.memory_space<vmem>>, vector<8x128xbf16>
    %1 = tpu.iota {dimensions = array<i32: 1>} : vector<8x8xi32>
    %c0_1 = arith.constant 0 : index
    %c0_2 = arith.constant 0 : index
    %2 = vector.load %arg1[%c0_1, %c0_2] : memref<8x1xi32, #tpu.memory_space<vmem>>, vector<8x1xi32>
    %3 = vector.broadcast %2 : vector<8x1xi32> to vector<8x8xi32>
    %4 = arith.cmpi eq, %3, %1 : vector<8x8xi32>
    %cst = arith.constant 1.000000e+00 : f32
    %cst_3 = arith.constant 0.000000e+00 : f32
    %5 = vector.broadcast %cst : f32 to vector<8x8xf32>
    %6 = vector.broadcast %cst_3 : f32 to vector<8x8xf32>
    %7 = arith.select %4, %5, %6 : vector<8x8xi1>, vector<8x8xf32>
    %8 = arith.truncf %7 : vector<8x8xf32> to vector<8x8xbf16>
    %c0_4 = arith.constant 0 : index
    %c0_5 = arith.constant 0 : index
    %9 = vector.load %arg2[%c0_4, %c0_5] : memref<8x1xi32, #tpu.memory_space<vmem>>, vector<8x1xi32>
    %10 = vector.broadcast %9 : vector<8x1xi32> to vector<8x8xi32>
    %11 = arith.cmpi eq, %10, %1 : vector<8x8xi32>
    %cst_6 = arith.constant 1.000000e+00 : f32
    %cst_7 = arith.constant 0.000000e+00 : f32
    %12 = vector.broadcast %cst_6 : f32 to vector<8x8xf32>
    %13 = vector.broadcast %cst_7 : f32 to vector<8x8xf32>
    %14 = arith.select %11, %12, %13 : vector<8x8xi1>, vector<8x8xf32>
    %15 = arith.truncf %14 : vector<8x8xf32> to vector<8x8xbf16>
    %cst_8 = arith.constant dense<0.000000e+00> : vector<8x128xf32>
    %16 = tpu.matmul %8, %0, %cst_8 {dimension_numbers = #tpu.dot_dimension_numbers<[1], [0], [0], [1], [0, 0, 1, 1], [], []>} : vector<8x8xbf16>, vector<8x128xbf16>, vector<8x128xf32> -> vector<8x128xf32>
    %17 = arith.truncf %16 : vector<8x128xf32> to vector<8x128xbf16>
    %cst_9 = arith.constant dense<0.000000e+00> : vector<8x128xf32>
    %18 = tpu.matmul %15, %0, %cst_9 {dimension_numbers = #tpu.dot_dimension_numbers<[1], [0], [0], [1], [0, 0, 1, 1], [], []>} : vector<8x8xbf16>, vector<8x128xbf16>, vector<8x128xf32> -> vector<8x128xf32>
    %19 = arith.truncf %18 : vector<8x128xf32> to vector<8x128xbf16>
    %c0_10 = arith.constant 0 : index
    %c0_11 = arith.constant 0 : index
    %20 = vector.load %arg4[%c0_10, %c0_11] : memref<128x128xbf16, #tpu.memory_space<vmem>>, vector<128x128xbf16>
    %cst_12 = arith.constant dense<0.000000e+00> : vector<8x128xf32>
    %21 = tpu.matmul %17, %20, %cst_12 {dimension_numbers = #tpu.dot_dimension_numbers<[1], [0], [0], [1], [0, 0, 1, 1], [], []>} : vector<8x128xbf16>, vector<128x128xbf16>, vector<8x128xf32> -> vector<8x128xf32>
    %c0_13 = arith.constant 0 : index
    %c0_14 = arith.constant 0 : index
    %22 = vector.load %arg5[%c0_13, %c0_14] : memref<128x128xbf16, #tpu.memory_space<vmem>>, vector<128x128xbf16>
    %cst_15 = arith.constant dense<0.000000e+00> : vector<8x128xf32>
    %23 = tpu.matmul %19, %22, %cst_15 {dimension_numbers = #tpu.dot_dimension_numbers<[1], [0], [0], [1], [0, 0, 1, 1], [], []>} : vector<8x128xbf16>, vector<128x128xbf16>, vector<8x128xf32> -> vector<8x128xf32>
    %24 = arith.mulf %21, %23 : vector<8x128xf32>
    %cst_16 = arith.constant dense<0.000000e+00> : vector<8xf32>
    %25 = vector.multi_reduction <add>, %24, %cst_16 [1] : vector<8x128xf32> to vector<8xf32>
    %26 = vector.shape_cast %25 : vector<8xf32> to vector<8x1xf32>
    %27 = arith.mulf %21, %21 : vector<8x128xf32>
    %cst_17 = arith.constant dense<0.000000e+00> : vector<8xf32>
    %28 = vector.multi_reduction <add>, %27, %cst_17 [1] : vector<8x128xf32> to vector<8xf32>
    %29 = vector.shape_cast %28 : vector<8xf32> to vector<8x1xf32>
    %30 = arith.mulf %23, %23 : vector<8x128xf32>
    %cst_18 = arith.constant dense<0.000000e+00> : vector<8xf32>
    %31 = vector.multi_reduction <add>, %30, %cst_18 [1] : vector<8x128xf32> to vector<8xf32>
    %32 = vector.shape_cast %31 : vector<8xf32> to vector<8x1xf32>
    %33 = math.rsqrt %29 : vector<8x1xf32>
    %cst_19 = arith.constant 1.000000e+08 : f32
    %34 = vector.broadcast %cst_19 : f32 to vector<8x1xf32>
    %35 = arith.minimumf %33, %34 : vector<8x1xf32>
    %36 = math.rsqrt %32 : vector<8x1xf32>
    %cst_20 = arith.constant 1.000000e+08 : f32
    %37 = vector.broadcast %cst_20 : f32 to vector<8x1xf32>
    %38 = arith.minimumf %36, %37 : vector<8x1xf32>
    %39 = arith.mulf %26, %35 : vector<8x1xf32>
    %40 = arith.mulf %39, %38 : vector<8x1xf32>
    %c8_i32 = arith.constant 8 : i32
    %41 = arith.muli %arg0, %c8_i32 : i32
    %42 = tpu.iota {dimensions = array<i32: 0>} : vector<8x1xi32>
    %43 = vector.broadcast %41 : i32 to vector<8x1xi32>
    %44 = arith.addi %43, %42 : vector<8x1xi32>
    %c4_i32 = arith.constant 4 : i32
    %45 = vector.broadcast %c4_i32 : i32 to vector<8x1xi32>
    %46 = arith.cmpi slt, %44, %45 : vector<8x1xi32>
    %cst_21 = arith.constant 1.000000e+00 : f32
    %cst_22 = arith.constant 0.000000e+00 : f32
    %47 = vector.broadcast %cst_21 : f32 to vector<8x1xf32>
    %48 = vector.broadcast %cst_22 : f32 to vector<8x1xf32>
    %49 = arith.select %46, %47, %48 : vector<8x1xi1>, vector<8x1xf32>
    %50 = arith.subf %40, %49 : vector<8x1xf32>
    %c8_i32_23 = arith.constant 8 : i32
    %51 = vector.broadcast %c8_i32_23 : i32 to vector<8x1xi32>
    %52 = arith.cmpi slt, %44, %51 : vector<8x1xi32>
    %53 = arith.mulf %50, %50 : vector<8x1xf32>
    %cst_24 = arith.constant 0.000000e+00 : f32
    %54 = vector.broadcast %cst_24 : f32 to vector<8x1xf32>
    %55 = arith.select %52, %53, %54 : vector<8x1xi1>, vector<8x1xf32>
    %56 = vector.shape_cast %55 : vector<8x1xf32> to vector<1x8x1xf32>
    %cst_25 = arith.constant dense<0.000000e+00> : vector<1xf32>
    %57 = vector.multi_reduction <add>, %56, %cst_25 [1, 2] : vector<1x8x1xf32> to vector<1xf32>
    %58 = vector.shape_cast %57 : vector<1xf32> to vector<1x1x1xf32>
    %59 = vector.extract %58[0, 0, 0] : f32 from vector<1x1x1xf32>
    %60 = vector.broadcast %59 : f32 to vector<1x8x128xf32>
    %c0_26 = arith.constant 0 : index
    %c0_27 = arith.constant 0 : index
    %c0_28 = arith.constant 0 : index
    %61 = vector.load %arg6[%c0_26, %c0_27, %c0_28] : memref<1x8x128xf32, #tpu.memory_space<vmem>>, vector<1x8x128xf32>
    tpu.vector_store %arg6[%c0_26, %c0_27, %c0_28], %60 {strides = array<i32>} : memref<1x8x128xf32, #tpu.memory_space<vmem>>, vector<1x8x128xf32>,
    return
  }
  func.func @transform_0(%arg0: i32) -> (i32, i32) {
    %c0_i32 = arith.constant 0 : i32
    %c0_i32_0 = arith.constant 0 : i32
    return %arg0, %c0_i32 : i32, i32
  }
  func.func @transform_1(%arg0: i32) -> (i32, i32) {
    %c0_i32 = arith.constant 0 : i32
    %c0_i32_0 = arith.constant 0 : i32
    return %arg0, %c0_i32 : i32, i32
  }
  func.func @transform_2(%arg0: i32) -> (i32, i32) {
    %c0_i32 = arith.constant 0 : i32
    %c0_i32_0 = arith.constant 0 : i32
    %c0_i32_1 = arith.constant 0 : i32
    return %c0_i32, %c0_i32_0 : i32, i32
  }
  func.func @transform_3(%arg0: i32) -> (i32, i32) {
    %c0_i32 = arith.constant 0 : i32
    %c0_i32_0 = arith.constant 0 : i32
    %c0_i32_1 = arith.constant 0 : i32
    return %c0_i32, %c0_i32_0 : i32, i32
  }
  func.func @transform_4(%arg0: i32) -> (i32, i32) {
    %c0_i32 = arith.constant 0 : i32
    %c0_i32_0 = arith.constant 0 : i32
    %c0_i32_1 = arith.constant 0 : i32
    return %c0_i32, %c0_i32_0 : i32, i32
  }
  func.func @transform_5(%arg0: i32) -> (i32, i32, i32) {
    %c0_i32 = arith.constant 0 : i32
    %c0_i32_0 = arith.constant 0 : i32
    %c0_i32_1 = arith.constant 0 : i32
    return %arg0, %c0_i32, %c0_i32_0 : i32, i32, i32
  }
}

</mosaic_0001>

<llo_original>
// kernel: cosine_similarity_loss1.1
$region0: #{cosine_similarity_loss1.1}
  #allocation0 [shape = 'u32[]', space=smem, size = 0x4, offset = 0x4, fixed_abs, tag = 'smem constant byte address 0x4 - core index']
  #allocation1 [shape = 'u32[72,128]{1,0:T(1,128)}', space=vmem, size = 0x9000, scoped, tag = 'internal scratch']
  %s0 = inlined_call_operand.vmem [shape: s32[8,1], index: 0, kind: input, shape index: {}]
  %s1 = inlined_call_operand.vmem [shape: s32[8,1], index: 1, kind: input, shape index: {}]
  %s2 = inlined_call_operand.vmem [shape: bf16[8,128], index: 2, kind: input, shape index: {}]
  %s3 = inlined_call_operand.vmem [shape: bf16[128,128], index: 3, kind: input, shape index: {}]
  %s4 = inlined_call_operand.vmem [shape: bf16[128,128], index: 4, kind: input, shape index: {}]
  %s5 = inlined_call_operand.vmem [shape: f32[1,8,128], index: 5, kind: output, shape index: {}]
  %s6 = sld [smem:[#allocation0]]
  $region30: #{cosine_similarity_loss1.1} parent=0
    _
  %s8 = ssub.s32 1, %s6
  %s9 = scalar_select 0, %s8, %s6
  // Predicated region
  $region2: #{cosine_similarity_loss1.1} parent=0 // pred_check
    _
  $region3: #{cosine_similarity_loss1.1} parent=0 // pred_check_branch
    %11 = sbr.rel (0) target = $region5
  $region4: #{cosine_similarity_loss1.1} parent=0 // pred_region
    _
  $region5: #{cosine_similarity_loss1.1} parent=0 // pred_fallthru
    _
  // Predicated region
  $region6: #{cosine_similarity_loss1.1} parent=0 // pred_check
    _
  $region7: #{cosine_similarity_loss1.1} parent=0 // pred_check_branch
    %13 = sbr.rel (0) target = $region9
  $region8: #{cosine_similarity_loss1.1} parent=0 // pred_region
    _
  $region9: #{cosine_similarity_loss1.1} parent=0 // pred_fallthru
    _
  // Predicated region
  $region10: #{cosine_similarity_loss1.1} parent=0 // pred_check
    _
  $region11: #{cosine_similarity_loss1.1} parent=0 // pred_check_branch
    %15 = sbr.rel (0) target = $region13
  $region12: #{cosine_similarity_loss1.1} parent=0 // pred_region
    _
  $region13: #{cosine_similarity_loss1.1} parent=0 // pred_fallthru
    _
  // Predicated region
  $region14: #{cosine_similarity_loss1.1} parent=0 // pred_check
    _
  $region15: #{cosine_similarity_loss1.1} parent=0 // pred_check_branch
    %17 = sbr.rel (0) target = $region17
  $region16: #{cosine_similarity_loss1.1} parent=0 // pred_region
    _
  $region17: #{cosine_similarity_loss1.1} parent=0 // pred_fallthru
    _
  // Predicated region
  $region18: #{cosine_similarity_loss1.1} parent=0 // pred_check
    _
  $region19: #{cosine_similarity_loss1.1} parent=0 // pred_check_branch
    %19 = sbr.rel (0) target = $region21
  $region20: #{cosine_similarity_loss1.1} parent=0 // pred_region
    _
  $region21: #{cosine_similarity_loss1.1} parent=0 // pred_fallthru
    _
  %v21 = vld [vmem:[%s2] sm:$0xf]
  %v22 = vlaneseq
  %v23 = vand.u32 %v22, 127
  %v24 = vld [vmem:[%s0] sm:$0xff]
  %25 = vset.pattern.permute.xlu0 0
  %26 = vperm.xlu0 %25, %v24
  %v27 = vpop.permute.xlu0 %26
  %vm28 = vcmp.eq.s32.totalorder %v27, %v23
  %v29 = vsel %vm28, 1.0, 0.0
  %v30 = vpack.c.bf16 %v29, %v29
  %v31 = vld [vmem:[%s1] sm:$0xff]
  %32 = vset.pattern.permute.xlu0 0
  %33 = vperm.xlu0 %32, %v31
  %v34 = vpop.permute.xlu0 %33
  %vm35 = vcmp.eq.s32.totalorder %v34, %v23
  %v36 = vsel %vm35, 1.0, 0.0
  %v37 = vpack.c.bf16 %v36, %v36
  %vm38 = vcmask 64512
  %v40 = vsel %vm38, %v30, 0
  %vm42 = vcmask 1043456
  %v44 = vsel %vm42, %v21, 0
  %46 = vmatpush.bf16.msra.mxu0 0
  %47 = vmatpush.bf16.msra.mxu0 0
  %48 = vmatpush.bf16.msra.mxu0 0
  %49 = vmatpush.bf16.msra.mxu0 0
  %50 = vmatpush.bf16.msra.mxu0 0
  %51 = vmatpush.bf16.msra.mxu0 0
  %52 = vmatpush.bf16.msra.mxu0 0
  %53 = vmatpush.bf16.msra.mxu0 %v44
  %54 = vmatmul.bf16.gmra.mxu0 %v40
  %v55 = vpop.f32.mrf.mxu0
  %v56 = vadd.f32 0.0, %v55
  %v57 = vpop.f32.mrf.mxu0
  %58 = vdwg.mxu0
  %v59 = vpack.c.bf16 %v56, %v56
  %v61 = vsel %vm38, %v37, 0
  %63 = vmatpush.bf16.msra.mxu0 0
  %64 = vmatpush.bf16.msra.mxu0 0
  %65 = vmatpush.bf16.msra.mxu0 0
  %66 = vmatpush.bf16.msra.mxu0 0
  %67 = vmatpush.bf16.msra.mxu0 0
  %68 = vmatpush.bf16.msra.mxu0 0
  %69 = vmatpush.bf16.msra.mxu0 0
  %70 = vmatpush.bf16.msra.mxu0 %v44
  %71 = vmatmul.bf16.gmra.mxu0 %v61
  %v72 = vpop.f32.mrf.mxu0
  %v73 = vadd.f32 0.0, %v72
  %v74 = vpop.f32.mrf.mxu0
  %75 = vdwg.mxu0
  %v76 = vpack.c.bf16 %v73, %v73
  %v77 = vld [vmem:[%s3] sm:$0xf]
  %v78 = vld [vmem:[%s3 + $0x4] sm:$0xf]
  %v79 = vld [vmem:[%s3 + $0x8] sm:$0xf]
  %v80 = vld [vmem:[%s3 + $0xc] sm:$0xf]
  %v81 = vld [vmem:[%s3 + $0x10] sm:$0xf]
  %v82 = vld [vmem:[%s3 + $0x14] sm:$0xf]
  %v83 = vld [vmem:[%s3 + $0x18] sm:$0xf]
  %v84 = vld [vmem:[%s3 + $0x1c] sm:$0xf]
  %v85 = vld [vmem:[%s3 + $0x20] sm:$0xf]
  %v86 = vld [vmem:[%s3 + $0x24] sm:$0xf]
  %v87 = vld [vmem:[%s3 + $0x28] sm:$0xf]
  %v88 = vld [vmem:[%s3 + $0x2c] sm:$0xf]
  %v89 = vld [vmem:[%s3 + $0x30] sm:$0xf]
  %v90 = vld [vmem:[%s3 + $0x34] sm:$0xf]
  %v91 = vld [vmem:[%s3 + $0x38] sm:$0xf]
  %v92 = vld [vmem:[%s3 + $0x3c] sm:$0xf]
  %v109 = vunpack.c.l.b16 %v77
  %v110 = vunpack.c.l.b16 %v78
  %v111 = vunpack.c.l.b16 %v79
  %v112 = vunpack.c.l.b16 %v80
  %v113 = vunpack.c.l.b16 %v81
  %v114 = vunpack.c.l.b16 %v82
  %v115 = vunpack.c.l.b16 %v83
  %v116 = vunpack.c.l.b16 %v84
  %v117 = vunpack.c.l.b16 %v85
  %v118 = vunpack.c.l.b16 %v86
  %v119 = vunpack.c.l.b16 %v87
  %v120 = vunpack.c.l.b16 %v88
  %v121 = vunpack.c.l.b16 %v89
  %v122 = vunpack.c.l.b16 %v90
  %v123 = vunpack.c.l.b16 %v91
  %v124 = vunpack.c.l.b16 %v92
  %v125 = vpack.c.b16 %v110, %v109
  %v126 = vpack.c.b16 %v112, %v111
  %v127 = vpack.c.b16 %v114, %v113
  %v128 = vpack.c.b16 %v116, %v115
  %v129 = vpack.c.b16 %v118, %v117
  %v130 = vpack.c.b16 %v120, %v119
  %v131 = vpack.c.b16 %v122, %v121
  %v132 = vpack.c.b16 %v124, %v123
  %141 = vmatpush.bf16.msra.mxu0 %v132
  %142 = vmatpush.bf16.msra.mxu0 %v131
  %143 = vmatpush.bf16.msra.mxu0 %v130
  %144 = vmatpush.bf16.msra.mxu0 %v129
  %145 = vmatpush.bf16.msra.mxu0 %v128
  %146 = vmatpush.bf16.msra.mxu0 %v127
  %147 = vmatpush.bf16.msra.mxu0 %v126
  %148 = vmatpush.bf16.msra.mxu0 %v125
  %149 = vmatmul.bf16.gmra.mxu0 %v59
  %v150 = vpop.f32.mrf.mxu0
  %v151 = vadd.f32 0.0, %v150
  %v152 = vpop.f32.mrf.mxu0
  %153 = vdwg.mxu0
  %v154 = vld [vmem:[%s4] sm:$0xf]
  %v155 = vld [vmem:[%s4 + $0x4] sm:$0xf]
  %v156 = vld [vmem:[%s4 + $0x8] sm:$0xf]
  %v157 = vld [vmem:[%s4 + $0xc] sm:$0xf]
  %v158 = vld [vmem:[%s4 + $0x10] sm:$0xf]
  %v159 = vld [vmem:[%s4 + $0x14] sm:$0xf]
  %v160 = vld [vmem:[%s4 + $0x18] sm:$0xf]
  %v161 = vld [vmem:[%s4 + $0x1c] sm:$0xf]
  %v162 = vld [vmem:[%s4 + $0x20] sm:$0xf]
  %v163 = vld [vmem:[%s4 + $0x24] sm:$0xf]
  %v164 = vld [vmem:[%s4 + $0x28] sm:$0xf]
  %v165 = vld [vmem:[%s4 + $0x2c] sm:$0xf]
  %v166 = vld [vmem:[%s4 + $0x30] sm:$0xf]
  %v167 = vld [vmem:[%s4 + $0x34] sm:$0xf]
  %v168 = vld [vmem:[%s4 + $0x38] sm:$0xf]
  %v169 = vld [vmem:[%s4 + $0x3c] sm:$0xf]
  %v186 = vunpack.c.l.b16 %v154
  %v187 = vunpack.c.l.b16 %v155
  %v188 = vunpack.c.l.b16 %v156
  %v189 = vunpack.c.l.b16 %v157
  %v190 = vunpack.c.l.b16 %v158
  %v191 = vunpack.c.l.b16 %v159
  %v192 = vunpack.c.l.b16 %v160
  %v193 = vunpack.c.l.b16 %v161
  %v194 = vunpack.c.l.b16 %v162
  %v195 = vunpack.c.l.b16 %v163
  %v196 = vunpack.c.l.b16 %v164
  %v197 = vunpack.c.l.b16 %v165
  %v198 = vunpack.c.l.b16 %v166
  %v199 = vunpack.c.l.b16 %v167
  %v200 = vunpack.c.l.b16 %v168
  %v201 = vunpack.c.l.b16 %v169
  %v202 = vpack.c.b16 %v187, %v186
  %v203 = vpack.c.b16 %v189, %v188
  %v204 = vpack.c.b16 %v191, %v190
  %v205 = vpack.c.b16 %v193, %v192
  %v206 = vpack.c.b16 %v195, %v194
  %v207 = vpack.c.b16 %v197, %v196
  %v208 = vpack.c.b16 %v199, %v198
  %v209 = vpack.c.b16 %v201, %v200
  %218 = vmatpush.bf16.msra.mxu0 %v209
  %219 = vmatpush.bf16.msra.mxu0 %v208
  %220 = vmatpush.bf16.msra.mxu0 %v207
  %221 = vmatpush.bf16.msra.mxu0 %v206
  %222 = vmatpush.bf16.msra.mxu0 %v205
  %223 = vmatpush.bf16.msra.mxu0 %v204
  %224 = vmatpush.bf16.msra.mxu0 %v203
  %225 = vmatpush.bf16.msra.mxu0 %v202
  %226 = vmatmul.bf16.gmra.mxu0 %v76
  %v227 = vpop.f32.mrf.mxu0
  %v228 = vadd.f32 0.0, %v227
  %v229 = vpop.f32.mrf.mxu0
  %230 = vdwg.mxu0
  %v231 = vmul.f32 %v151, %v228
  %232 = vadd.xlane.f32.xlu0 %v231
  %v233 = vpop.xlane.xlu0 %232
  %v234 = vmul.f32 %v151, %v151
  %235 = vadd.xlane.f32.xlu0 %v234
  %v236 = vpop.xlane.xlu0 %235
  %v237 = vmul.f32 %v228, %v228
  %238 = vadd.xlane.f32.xlu0 %v237
  %v239 = vpop.xlane.xlu0 %238
  %v240 = vrsqrt.pop %v236
  %v241 = vmul.f32 %v240, %v236
  %v242 = vmul.f32 %v241, %v240
  %v243 = vmul.f32 0.5, %v242
  %v244 = vsub.f32 1.5, %v243
  %v245 = vmul.f32 %v240, %v244
  %vm246 = vweird.f32 %v236
  %vm247 = vweird.f32 %v240
  %vm248 = vmor %vm246, %vm247
  %v249 = vsel %vm248, %v240, %v245
  %v250 = vmin.f32 %v249, 1e+08
  %v251 = vrsqrt.pop %v239
  %v252 = vmul.f32 %v251, %v239
  %v253 = vmul.f32 %v252, %v251
  %v254 = vmul.f32 0.5, %v253
  %v255 = vsub.f32 1.5, %v254
  %v256 = vmul.f32 %v251, %v255
  %vm257 = vweird.f32 %v239
  %vm258 = vweird.f32 %v251
  %vm259 = vmor %vm257, %vm258
  %v260 = vsel %vm259, %v251, %v256
  %v261 = vmin.f32 %v260, 1e+08
  %v262 = vmul.f32 %v233, %v250
  %v263 = vmul.f32 %v262, %v261
  %s264 = smul.u32 0, 8
  %v265 = vlaneseq
  %v266 = vshrl.u32 %v265, 7
  %v267 = vstv %s264
  %v268 = vadd.s32 %v267, %v266
  %vm269 = vcmp.lt.s32.totalorder %v268, 4
  %v270 = vsel %vm269, 1.0, 0.0
  %v271 = vsub.f32 %v263, %v270
  %vm272 = vcmp.lt.s32.totalorder %v268, 8
  %v273 = vmul.f32 %v271, %v271
  %v274 = vsel %vm272, %v273, 0.0
  %vm275 = vcmask 7168
  %v276 = vsel %vm275, %v274, 0.0
  %277 = vadd.xlane.f32.xlu0 %v276
  %v278 = vpop.xlane.xlu0 %277
  %v279 = vrot.slane %v278, 4
  %v280 = vadd.f32 %v278, %v279
  %v281 = vrot.slane %v280, 2
  %v282 = vadd.f32 %v280, %v281
  %v283 = vrot.slane %v282, 1
  %v284 = vadd.f32 %v282, %v283
  %s285 = vtos %v284
  %v286 = vstv %s285
  %287 = vst [vmem:[%s5] sm:$0xff] %v286
  // Predicated region
  $region22: #{cosine_similarity_loss1.1} parent=0 // pred_check
    _
  $region23: #{cosine_similarity_loss1.1} parent=0 // pred_check_branch
    %289 = sbr.rel (0) target = $region25
  $region24: #{cosine_similarity_loss1.1} parent=0 // pred_region
    _
  $region25: #{cosine_similarity_loss1.1} parent=0 // pred_fallthru
    _
  // Predicated region
  $region26: #{cosine_similarity_loss1.1} parent=0 // pred_check
    _
  $region27: #{cosine_similarity_loss1.1} parent=0 // pred_check_branch
    %291 = sbr.rel (0) target = $region29
  $region28: #{cosine_similarity_loss1.1} parent=0 // pred_region
    _
  $region29: #{cosine_similarity_loss1.1} parent=0 // pred_fallthru
    _

</llo_original>
